<compile_context>
chip_gen: v5e
topology: v5e:2x2
jax: 0.10.0
libtpu: 0.0.40
codegen_flags: <defaults>
</compile_context>

<pallas_src>
import functools
import numpy as np

import jax
import jax.numpy as jnp
from jax.experimental import pallas as pl
from jax.experimental.pallas import tpu as pltpu


def _round_up(x, m):
    return (x + m - 1) // m * m


# ----------------------------------------------------------------------------
# Pallas kernels
# ----------------------------------------------------------------------------
def _mm_kernel(a_ref, b_ref, c_ref, o_ref, acc_ref, *, relu):
    """out = maybe_relu(A @ B + bias); bf16 operands/out, f32 accumulate."""
    k = pl.program_id(2)

    @pl.when(k == 0)
    def _():
        acc_ref[...] = jnp.zeros_like(acc_ref)

    acc_ref[...] += jnp.dot(a_ref[...], b_ref[...],
                            preferred_element_type=jnp.float32)

    @pl.when(k == pl.num_programs(2) - 1)
    def _():
        out = acc_ref[...] + c_ref[...]
        if relu:  # static python bool
            out = jnp.maximum(out, 0.0)
        o_ref[...] = out.astype(o_ref.dtype)


@functools.lru_cache(maxsize=None)
def _make_matmul(Mp, Kp, Np, relu, tm, tn, tk):
    grid = (Mp // tm, Np // tn, Kp // tk)
    return pl.pallas_call(
        functools.partial(_mm_kernel, relu=relu),
        out_shape=jax.ShapeDtypeStruct((Mp, Np), jnp.bfloat16),
        grid_spec=pltpu.PrefetchScalarGridSpec(
            num_scalar_prefetch=0,
            grid=grid,
            in_specs=[
                pl.BlockSpec((tm, tk), lambda i, j, k: (i, k)),
                pl.BlockSpec((tk, tn), lambda i, j, k: (k, j)),
                pl.BlockSpec((1, tn), lambda i, j, k: (0, j)),
            ],
            out_specs=pl.BlockSpec((tm, tn), lambda i, j, k: (i, j)),
            scratch_shapes=[pltpu.VMEM((tm, tn), jnp.float32)],
        ),
        compiler_params=pltpu.CompilerParams(
            dimension_semantics=("parallel", "parallel", "arbitrary"),
            vmem_limit_bytes=48 * 1024 * 1024),
    )


def _grouped_mm_kernel(a_ref, b_ref, c_ref, o_ref, *, relu, chunks, kc):
    """Several 128-lane output chunks of a grouped conv per grid step."""
    for c in range(chunks):  # static unrolled loop; each chunk is one MXU GEMM
        acc = jnp.dot(a_ref[:, c * kc:(c + 1) * kc], b_ref[c],
                      preferred_element_type=jnp.float32)
        out = acc + c_ref[:, c * 128:(c + 1) * 128]
        if relu:
            out = jnp.maximum(out, 0.0)
        o_ref[:, c * 128:(c + 1) * 128] = out.astype(o_ref.dtype)


@functools.lru_cache(maxsize=None)
def _make_grouped_matmul(Mp, Kc, n_chunks, n_splits, relu, tm):
    cps = n_chunks // n_splits          # chunks per grid step
    grid = (Mp // tm, n_splits)
    return pl.pallas_call(
        functools.partial(_grouped_mm_kernel, relu=relu, chunks=cps, kc=Kc),
        out_shape=jax.ShapeDtypeStruct((Mp, n_chunks * 128), jnp.bfloat16),
        grid_spec=pltpu.PrefetchScalarGridSpec(
            num_scalar_prefetch=0,
            grid=grid,
            in_specs=[
                pl.BlockSpec((tm, cps * Kc), lambda i, s: (i, s)),
                pl.BlockSpec((cps, Kc, 128), lambda i, s: (s, 0, 0)),
                pl.BlockSpec((1, cps * 128), lambda i, s: (0, s)),
            ],
            out_specs=pl.BlockSpec((tm, cps * 128), lambda i, s: (i, s)),
        ),
        compiler_params=pltpu.CompilerParams(
            dimension_semantics=("parallel", "parallel"),
            vmem_limit_bytes=48 * 1024 * 1024),
    )


# ----------------------------------------------------------------------------
# GEMM wrappers (per-layer tile selection, bf16 cast, activation padding)
# ----------------------------------------------------------------------------
def _pick_tm(M):
    if M >= 4096:
        return 1024
    if M >= 1024:
        return 512
    if M >= 256:
        return 256
    return 128


def _pick_tk(Kp, cap=2048):
    """Largest multiple-of-128 divisor of Kp, capped (handles 1152/2304/4608 K)."""
    best = 128
    t = 128
    limit = min(Kp, cap)
    while t <= limit:
        if Kp % t == 0:
            best = t
        t += 128
    return best


def _pick_tn(Mp, tm, Np):
    """Widest N tile (<=512) while keeping >=2 parallel blocks when possible (v7x)."""
    m_blocks = Mp // tm
    for t in (512, 256, 128):
        if t > Np or Np % t:
            continue
        if m_blocks >= 2 or (Np // t) >= 2 or Np == 128:
            return t
    return 128


def dense_matmul(A, Bp, bp, relu):
    """A:(M,K); Bp:(Kp,Np) bf16 pre-padded (BN scale folded in); bp:(1,Np) f32.
    Returns (Mp,Np) bf16."""
    M, K = A.shape
    Kp, Np = Bp.shape
    tm = _pick_tm(M)
    Mp = _round_up(M, tm)
    tn = _pick_tn(Mp, tm, Np)
    tk = _pick_tk(Kp)
    Ap = jnp.pad(A.astype(jnp.bfloat16), ((0, Mp - M), (0, Kp - K)))
    return _make_matmul(Mp, Kp, Np, bool(relu), tm, tn, tk)(Ap, Bp, bp)


def grouped_matmul(A, Wc, bp, relu):
    """A:(M, n_chunks*Kc) chunk/channel-major; Wc:(n_chunks,Kc,128) bf16 (scale
    folded in); bp:(1, n_chunks*128). Returns (Mp, n_chunks*128) bf16."""
    M, _ = A.shape
    n_chunks, Kc, _ = Wc.shape
    tm = _pick_tm(M)
    Mp = _round_up(M, tm)
    n_splits = 2 if (n_chunks >= 2 and n_chunks % 2 == 0) else 1
    Ap = jnp.pad(A.astype(jnp.bfloat16), ((0, Mp - M), (0, 0)))
    return _make_grouped_matmul(Mp, Kc, n_chunks, n_splits, bool(relu), tm)(Ap, Wc, bp)


# ----------------------------------------------------------------------------
# im2col / maxpool glue (NHWC, pure indexing; all GEMMs run in Pallas)
# TODO(synk): fuse im2col into the kernel (kh/kw as extra K-grid axes whose
#             index_map offsets into the padded NHWC activation) to avoid the
#             kh*kw HBM amplification of the materialized patch tensor.
# ----------------------------------------------------------------------------
def _im2col(x, kh, kw, stride, ph, pw):
    """x:(N,H,W,C) -> (N*OH*OW, C*kh*kw) with channel-major K ordering (c, kh, kw)."""
    N, H, W, C = x.shape
    if kh == 1 and kw == 1 and ph == 0 and pw == 0:
        OH = (H - 1) // stride + 1
        OW = (W - 1) // stride + 1
        return x[:, ::stride, ::stride, :].reshape(N * OH * OW, C), OH, OW
    xp = jnp.pad(x, ((0, 0), (ph, ph), (pw, pw), (0, 0)))
    OH = (H + 2 * ph - kh) // stride + 1
    OW = (W + 2 * pw - kw) // stride + 1
    pats = [xp[:, i:i + stride * (OH - 1) + 1:stride,
               j:j + stride * (OW - 1) + 1:stride, :]
            for i in range(kh) for j in range(kw)]          # each (N, OH, OW, C)
    patches = jnp.stack(pats, axis=-1)                       # (N, OH, OW, C, kh*kw)
    return patches.reshape(N * OH * OW, C * kh * kw), OH, OW


def maxpool3x3s2p1(x):
    N, H, W, C = x.shape
    xp = jnp.pad(x, ((0, 0), (1, 1), (1, 1), (0, 0)), constant_values=-jnp.inf)
    OH = (H + 2 - 3) // 2 + 1
    OW = (W + 2 - 3) // 2 + 1
    pats = [xp[:, i:i + 2 * (OH - 1) + 1:2, j:j + 2 * (OW - 1) + 1:2, :]
            for i in range(3) for j in range(3)]
    return jnp.max(jnp.stack(pats, axis=0), axis=0)


# ----------------------------------------------------------------------------
# Layers (parameters built deterministically with numpy, pre-padded, bf16 weights)
# ----------------------------------------------------------------------------
class ConvBN:
    """Conv2d(bias=False) + inference-mode BatchNorm (+ optional ReLU), NHWC.
    BN scale is folded into the weight (in f32) before the bf16 cast."""

    def __init__(self, rng, cin, cout, k, stride, padding, groups=1, relu=True):
        cin_g, cout_g = cin // groups, cout // groups
        std = np.sqrt(2.0 / (cin_g * k * k))
        w = rng.normal(0.0, std, (cout, cin_g, k, k)).astype(np.float32)
        gamma = rng.uniform(0.8, 1.2, cout).astype(np.float32)
        beta = rng.uniform(-0.1, 0.1, cout).astype(np.float32)
        run_mean = np.zeros(cout, np.float32)
        run_var = np.ones(cout, np.float32)
        s = gamma / np.sqrt(run_var + 1e-5)
        b = beta - run_mean * s

        self.k, self.stride, self.padding = k, stride, padding
        self.cout, self.relu = cout, relu
        self.grouped = groups > 1

        if not self.grouped:
            K = cin * k * k
            Kp, Np = _round_up(K, 128), _round_up(cout, 128)
            w2 = w.reshape(cout, K) * s[:, None]                  # fold scale (f32)
            Bp = np.zeros((Kp, Np), np.float32)
            Bp[:K, :cout] = w2.T
            bp = np.zeros((1, Np), np.float32); bp[0, :cout] = b
            self.params = (jnp.asarray(Bp, jnp.bfloat16), jnp.asarray(bp))
        else:
            # Chunked grouped GEMM: pack Gc groups per 128-wide output chunk so each
            # chunk GEMM is lane-dense while only Gc-fold (not groups-fold) padded.
            assert cout % 128 == 0 and groups % (cout // 128) == 0
            n_chunks = cout // 128
            Gc = groups // n_chunks          # groups per chunk
            Kc = Gc * cin_g * k * k          # K per chunk (channel-major within chunk)
            assert Kc % 128 == 0, "chunk K must be lane-aligned"
            Wc = np.zeros((n_chunks, Kc, 128), np.float32)
            for g in range(groups):
                ci, gl = g // Gc, g % Gc
                sg = s[g * cout_g:(g + 1) * cout_g]
                wg = (w[g * cout_g:(g + 1) * cout_g].reshape(cout_g, cin_g * k * k)
                      * sg[:, None])                               # fold scale (f32)
                Wc[ci, gl * cin_g * k * k:(gl + 1) * cin_g * k * k,
                   gl * cout_g:(gl + 1) * cout_g] = wg.T
            self.params = (jnp.asarray(Wc, jnp.bfloat16),
                           jnp.asarray(b.reshape(1, cout)))

    def apply(self, p, x):
        N = x.shape[0]
        A, OH, OW = _im2col(x, self.k, self.k, self.stride,
                            self.padding, self.padding)
        M = A.shape[0]
        if self.grouped:
            out = grouped_matmul(A, p[0], p[1], self.relu)
        else:
            out = dense_matmul(A, p[0], p[1], self.relu)
        return out[:M, :self.cout].reshape(N, OH, OW, self.cout)


class ConvT:
    """ConvTranspose2d(bias=False), padding=0, NHWC.

    * 1x1 spatial input: direct (N,cin) @ (cin, k*k*cout) GEMM (no im2col blow-up).
    * stride>1: s*s sub-pixel stride-1 correlations (no zero-dilated input).
    * stride=1: single flipped-kernel correlation with pad k-1.
    """

    def __init__(self, rng, cin, cout, k, stride):
        std = np.sqrt(1.0 / (cin * k * k))
        w = rng.normal(0.0, std, (cin, cout, k, k)).astype(np.float32)  # torch layout
        self.k, self.stride, self.cout = k, stride, cout
        Np = _round_up(cout, 128)
        bp = np.zeros((1, Np), np.float32)
        s = stride
        self.phases, Bs = [], []
        for rh in range(s):
            for rw in range(s):
                wsub = w[:, :, rh::s, rw::s]                       # (cin,cout,Th,Tw)
                Th, Tw = wsub.shape[2], wsub.shape[3]
                w2 = np.flip(wsub, (2, 3)).transpose(1, 0, 2, 3)   # (cout,cin,Th,Tw)
                K = cin * Th * Tw
                Kp = _round_up(K, 128)
                Bp_ = np.zeros((Kp, Np), np.float32)
                Bp_[:K, :cout] = w2.reshape(cout, K).T
                self.phases.append((rh, rw, Th, Tw))
                Bs.append(jnp.asarray(Bp_, jnp.bfloat16))
        # Direct weight for 1x1 spatial inputs (only stride-1 layers in this model
        # can see them): out[n, i, j, co] = sum_c x[n, c] * w[c, co, i, j].
        Bd, bpd = None, None
        if stride == 1:
            Nd = k * k * cout
            Ndp = _round_up(Nd, 128)
            Kdp = _round_up(cin, 128)
            Bd_ = np.zeros((Kdp, Ndp), np.float32)
            Bd_[:cin, :Nd] = w.transpose(0, 2, 3, 1).reshape(cin, Nd)
            Bd = jnp.asarray(Bd_, jnp.bfloat16)
            bpd = jnp.zeros((1, Ndp), jnp.float32)
        self.params = (tuple(Bs), jnp.asarray(bp), Bd, bpd)

    def apply(self, p, x):
        Bs, bp, Bd, bpd = p
        N, H, W, _ = x.shape
        s, k, cout = self.stride, self.k, self.cout
        if H == 1 and W == 1 and Bd is not None:
            # 1x1 spatial input: single dense GEMM, output stamped as (k, k, cout).
            A = x.reshape(N, -1)
            y = dense_matmul(A, Bd, bpd, relu=False)
            return y[:N, :k * k * cout].reshape(N, k, k, cout)
        if s == 1:
            _, _, Th, Tw = self.phases[0]
            A, oh, ow = _im2col(x, Th, Tw, 1, Th - 1, Tw - 1)
            y = dense_matmul(A, Bs[0], bp, relu=False)
            return y[:N * oh * ow, :cout].reshape(N, oh, ow, cout)
        OH, OW = (H - 1) * s + k, (W - 1) * s + k
        out = jnp.zeros((N, OH, OW, cout), jnp.bfloat16)
        for i, (rh, rw, Th, Tw) in enumerate(self.phases):
            A, oh, ow = _im2col(x, Th, Tw, 1, Th - 1, Tw - 1)
            y = dense_matmul(A, Bs[i], bp, relu=False)
            y = y[:N * oh * ow, :cout].reshape(N, oh, ow, cout)
            out = out.at[:, rh::s, rw::s, :].set(y)
        return out


class Bottleneck:
    expansion = 4

    def __init__(self, rng, inplanes, planes, stride, groups=32, base_width=4,
                 downsample=False):
        width = int(planes * (base_width / 64.0)) * groups
        self.conv1 = ConvBN(rng, inplanes, width, 1, 1, 0, relu=True)
        self.conv2 = ConvBN(rng, width, width, 3, stride, 1, groups=groups, relu=True)
        self.conv3 = ConvBN(rng, width, planes * 4, 1, 1, 0, relu=False)
        self.downsample = (ConvBN(rng, inplanes, planes * 4, 1, stride, 0, relu=False)
                           if downsample else None)
        self.params = {
            "conv1": self.conv1.params, "conv2": self.conv2.params,
            "conv3": self.conv3.params,
            "downsample": self.downsample.params if self.downsample else None,
        }

    def apply(self, p, x):
        identity = (self.downsample.apply(p["downsample"], x)
                    if self.downsample is not None else x)
        out = self.conv1.apply(p["conv1"], x)
        out = self.conv2.apply(p["conv2"], out)
        out = self.conv3.apply(p["conv3"], out)
        return jnp.maximum(out + identity, 0.0)   # residual add + ReLU, bf16 glue


class RGB2RGBAutoencoderPallas:
    """encoder = ResNeXt50_32x4d children()[:-2]; decoder = 6 ConvTranspose2d."""

    def __init__(self, seed=0):
        rng = np.random.RandomState(seed)
        # ----- encoder (ResNeXt50_32x4d backbone) -----
        self.conv1 = ConvBN(rng, 3, 64, 7, 2, 3, relu=True)
        self.layers = []
        inplanes = 64
        for planes, blocks, stride in [(64, 3, 1), (128, 4, 2),
                                       (256, 6, 2), (512, 3, 2)]:
            layer = []
            for bidx in range(blocks):
                st = stride if bidx == 0 else 1
                ds = (bidx == 0) and (st != 1 or inplanes != planes * 4)
                layer.append(Bottleneck(rng, inplanes, planes, st, 32, 4, ds))
                inplanes = planes * 4
            self.layers.append(layer)
        # ----- decoder -----
        cfg = [(2048, 512, 5, 1), (512, 256, 5, 2), (256, 128, 5, 2),
               (128, 64, 5, 2), (64, 32, 5, 2), (32, 3, 4, 1)]
        self.decoder = [ConvT(rng, ci, co, k, s) for ci, co, k, s in cfg]

        self.params = {
            "conv1": self.conv1.params,
            "layers": [[blk.params for blk in layer] for layer in self.layers],
            "decoder": [d.params for d in self.decoder],
        }
        self._jit_forward = jax.jit(self._forward)

    def _forward(self, params, x_nchw):
        # NCHW -> NHWC + bf16 once; all layers keep bf16 activations.
        x = jnp.transpose(x_nchw, (0, 2, 3, 1)).astype(jnp.bfloat16)
        x = self.conv1.apply(params["conv1"], x)
        x = maxpool3x3s2p1(x)
        for li, layer in enumerate(self.layers):
            for bi, blk in enumerate(layer):
                x = blk.apply(params["layers"][li][bi], x)
        features = x
        f = features
        for di, dec in enumerate(self.decoder):
            f = dec.apply(params["decoder"][di], f)
        decoded = jnp.transpose(f, (0, 3, 1, 2)).astype(jnp.float32)
        features_nchw = jnp.transpose(features, (0, 3, 1, 2)).astype(jnp.float32)
        return decoded, features_nchw

    def __call__(self, x):
        return self._jit_forward(self.params, x)


# ----------------------------------------------------------------------------
if __name__ == "__main__":
    key = jax.random.PRNGKey(0)
    ka, kb, kx = jax.random.split(key, 3)

    # --- dense Pallas GEMM sanity check (bf16 operands/out, f32 accumulate) ---
    A = jax.random.normal(ka, (37, 200), jnp.float32)
    B = jax.random.normal(kb, (200, 70), jnp.float32)
    s = jnp.linspace(0.5, 1.5, 70, dtype=jnp.float32)
    c = jnp.linspace(-0.2, 0.2, 70, dtype=jnp.float32)
    Bs_f32 = B * s[None, :]                       # scale folded into weight (f32)
    Kp, Np = _round_up(200, 128), _round_up(70, 128)
    Bp = jnp.zeros((Kp, Np), jnp.bfloat16).at[:200, :70].set(Bs_f32.astype(jnp.bfloat16))
    cp = jnp.zeros((1, Np), jnp.float32).at[0, :70].set(c)
    got = dense_matmul(A, Bp, cp, relu=True)[:37, :70].astype(jnp.float32)
    Ab = A.astype(jnp.bfloat16).astype(jnp.float32)
    Bb = Bs_f32.astype(jnp.bfloat16).astype(jnp.float32)
    ref = jnp.maximum(Ab @ Bb + c, 0.0)
    assert jnp.allclose(ref, got, atol=1e-1, rtol=5e-2), "dense GEMM kernel mismatch"

    # --- grouped (multi-chunk) Pallas GEMM sanity check ---
    kA, kW = jax.random.split(kb)
    n_chunks, Kc = 4, 256
    Ag = jax.random.normal(kA, (40, n_chunks * Kc), jnp.float32).astype(jnp.bfloat16)
    Wg = jax.random.normal(kW, (n_chunks, Kc, 128), jnp.float32).astype(jnp.bfloat16)
    bg = jnp.zeros((1, n_chunks * 128), jnp.float32)
    gout = grouped_matmul(Ag, Wg, bg, relu=False)[:40].astype(jnp.float32)
    Af, Wf = Ag.astype(jnp.float32), Wg.astype(jnp.float32)
    gref = jnp.concatenate([Af[:, ci * Kc:(ci + 1) * Kc] @ Wf[ci]
                            for ci in range(n_chunks)], axis=1)
    assert jnp.allclose(gref, gout, atol=1e-1, rtol=5e-2), "grouped GEMM kernel mismatch"

    # --- full autoencoder forward on (2, 3, 32, 32) NCHW ---
    model = RGB2RGBAutoencoderPallas(seed=0)
    x = jax.random.normal(kx, (2, 3, 32, 32), jnp.float32)
    decoded, features = model(x)
    decoded = jax.block_until_ready(decoded)
    features = jax.block_until_ready(features)

    assert features.shape == (2, 2048, 1, 1), features.shape
    assert decoded.shape == (2, 3, 128, 128), decoded.shape
    assert bool(jnp.all(jnp.isfinite(decoded))) and bool(jnp.all(jnp.isfinite(features)))

    print("KERNEL_OK")
</pallas_src>

<mosaic_0001>
module attributes {stable_mosaic.version = 11 : i64} {
  func.func @_mm_kernel(%arg0: i32, %arg1: i32, %arg2: i32, %arg3: memref<128x256xbf16, #tpu.memory_space<vmem>>, %arg4: memref<256x128xbf16, #tpu.memory_space<vmem>>, %arg5: memref<1x128xf32, #tpu.memory_space<vmem>>, %arg6: memref<128x128xbf16, #tpu.memory_space<vmem>>, %arg7: memref<128x128xf32, #tpu.memory_space<vmem>>) attributes {dimension_semantics = [#tpu.dimension_semantics<parallel>, #tpu.dimension_semantics<parallel>, #tpu.dimension_semantics<arbitrary>], iteration_bounds = array<i64: 1, 1, 1>, scalar_prefetch = 0 : i64, scratch_operands = 1 : i64, tpu.core_type = #tpu.core_type<tc>, window_params = [{transform_indices = @transform_0, window_bounds = array<i64: 128, 256>}, {transform_indices = @transform_1, window_bounds = array<i64: 256, 128>}, {transform_indices = @transform_2, window_bounds = array<i64: 1, 128>}, {transform_indices = @transform_3, window_bounds = array<i64: 128, 128>}]} {
    %c0_i32 = arith.constant 0 : i32
    %0 = arith.cmpi eq, %arg2, %c0_i32 : i32
    %1 = arith.extui %0 : i1 to i32
    %c0_i32_0 = arith.constant 0 : i32
    %2 = arith.cmpi ne, %1, %c0_i32_0 : i32
    scf.if %2 {
      %cst_10 = arith.constant 0.000000e+00 : f32
      %12 = vector.broadcast %cst_10 : f32 to vector<128x128xf32>
      %c0_11 = arith.constant 0 : index
      %c0_12 = arith.constant 0 : index
      %13 = vector.load %arg7[%c0_11, %c0_12] : memref<128x128xf32, #tpu.memory_space<vmem>>, vector<128x128xf32>
      tpu.vector_store %arg7[%c0_11, %c0_12], %12 {strides = array<i32>} : memref<128x128xf32, #tpu.memory_space<vmem>>, vector<128x128xf32>,
    } else {
    }
    %c0 = arith.constant 0 : index
    %c0_1 = arith.constant 0 : index
    %3 = vector.load %arg7[%c0, %c0_1] : memref<128x128xf32, #tpu.memory_space<vmem>>, vector<128x128xf32>
    %c0_2 = arith.constant 0 : index
    %c0_3 = arith.constant 0 : index
    %4 = vector.load %arg3[%c0_2, %c0_3] : memref<128x256xbf16, #tpu.memory_space<vmem>>, vector<128x256xbf16>
    %c0_4 = arith.constant 0 : index
    %c0_5 = arith.constant 0 : index
    %5 = vector.load %arg4[%c0_4, %c0_5] : memref<256x128xbf16, #tpu.memory_space<vmem>>, vector<256x128xbf16>
    %cst = arith.constant dense<0.000000e+00> : vector<128x128xf32>
    %6 = tpu.matmul %4, %5, %cst {dimension_numbers = #tpu.dot_dimension_numbers<[1], [0], [0], [1], [0, 0, 1, 1], [], []>} : vector<128x256xbf16>, vector<256x128xbf16>, vector<128x128xf32> -> vector<128x128xf32>
    %7 = arith.addf %3, %6 : vector<128x128xf32>
    %c0_6 = arith.constant 0 : index
    %c0_7 = arith.constant 0 : index
    %8 = vector.load %arg7[%c0_6, %c0_7] : memref<128x128xf32, #tpu.memory_space<vmem>>, vector<128x128xf32>
    tpu.vector_store %arg7[%c0_6, %c0_7], %7 {strides = array<i32>} : memref<128x128xf32, #tpu.memory_space<vmem>>, vector<128x128xf32>,
    %c0_i32_8 = arith.constant 0 : i32
    %9 = arith.cmpi eq, %arg2, %c0_i32_8 : i32
    %10 = arith.extui %9 : i1 to i32
    %c0_i32_9 = arith.constant 0 : i32
    %11 = arith.cmpi ne, %10, %c0_i32_9 : i32
    scf.if %11 {
      %c0_10 = arith.constant 0 : index
      %c0_11 = arith.constant 0 : index
      %12 = vector.load %arg7[%c0_10, %c0_11] : memref<128x128xf32, #tpu.memory_space<vmem>>, vector<128x128xf32>
      %c0_12 = arith.constant 0 : index
      %c0_13 = arith.constant 0 : index
      %13 = vector.load %arg5[%c0_12, %c0_13] : memref<1x128xf32, #tpu.memory_space<vmem>>, vector<1x128xf32>
      %14 = vector.broadcast %13 : vector<1x128xf32> to vector<128x128xf32>
      %15 = arith.addf %12, %14 : vector<128x128xf32>
      %cst_14 = arith.constant 0.000000e+00 : f32
      %16 = vector.broadcast %cst_14 : f32 to vector<128x128xf32>
      %17 = arith.maximumf %15, %16 : vector<128x128xf32>
      %18 = arith.truncf %17 : vector<128x128xf32> to vector<128x128xbf16>
      %c0_15 = arith.constant 0 : index
      %c0_16 = arith.constant 0 : index
      %19 = vector.load %arg6[%c0_15, %c0_16] : memref<128x128xbf16, #tpu.memory_space<vmem>>, vector<128x128xbf16>
      tpu.vector_store %arg6[%c0_15, %c0_16], %18 {strides = array<i32>} : memref<128x128xbf16, #tpu.memory_space<vmem>>, vector<128x128xbf16>,
    } else {
    }
    return
  }
  func.func @transform_0(%arg0: i32, %arg1: i32, %arg2: i32) -> (i32, i32) {
    %c0_i32 = arith.constant 0 : i32
    return %arg0, %arg2 : i32, i32
  }
  func.func @transform_1(%arg0: i32, %arg1: i32, %arg2: i32) -> (i32, i32) {
    %c0_i32 = arith.constant 0 : i32
    return %arg2, %arg1 : i32, i32
  }
  func.func @transform_2(%arg0: i32, %arg1: i32, %arg2: i32) -> (i32, i32) {
    %c0_i32 = arith.constant 0 : i32
    %c0_i32_0 = arith.constant 0 : i32
    return %c0_i32, %arg1 : i32, i32
  }
  func.func @transform_3(%arg0: i32, %arg1: i32, %arg2: i32) -> (i32, i32) {
    %c0_i32 = arith.constant 0 : i32
    return %arg0, %arg1 : i32, i32
  }
}

</mosaic_0001>

<llo_original>
// kernel: tpu_custom_call.1
$region0: #{tpu_custom_call.1}
  #allocation0 [shape = 'u32[]', space=smem, size = 0x4, offset = 0x4, fixed_abs, tag = 'smem constant byte address 0x4 - core index']
  #allocation1 [shape = 'u32[72,128]{1,0:T(1,128)}', space=vmem, size = 0x9000, scoped, tag = 'internal scratch']
  #allocation2 [shape = 'f32[128,128]{1,0:T(8,128)}', space=vmem, size = 0x10000, scoped, tag = 'scratch operand']
  %s0 = inlined_call_operand.hbm [shape: bf16[128,256], index: 0, kind: input, shape index: {}]
  %s1 = inlined_call_operand.hbm [shape: bf16[256,128], index: 1, kind: input, shape index: {}]
  %s2 = inlined_call_operand.vmem [shape: f32[1,128], index: 2, kind: input, shape index: {}]
  %s3 = inlined_call_operand.hbm [shape: bf16[128,128], index: 3, kind: output, shape index: {}]
  %s4 = sld [smem:[#allocation0]]
  $region38: #{tpu_custom_call.1} parent=0
    _
  %s6 = ssub.s32 1, %s4
  %s7 = scalar_select 0, %s6, %s4
  $region1: #{tpu_custom_call.1} parent=0
    #allocation3 [shape = 'u8[65536]{0}', space=vmem, size = 0x10000, scoped, tag = 'input window, operand 0, single buffered']
    #allocation4 [shape = 's32[1]{0}', space=sflag, size = 0x4, scoped, tag = 'scoped memory for tpu_custom_call.1']
    #allocation5 [shape = 's32[1]{0}', space=sflag, size = 0x4, scoped, tag = 'scoped memory for tpu_custom_call.1']
    #allocation6 [shape = 'u8[65536]{0}', space=vmem, size = 0x10000, scoped, tag = 'input window, operand 1, single buffered']
    #allocation7 [shape = 's32[1]{0}', space=sflag, size = 0x4, scoped, tag = 'scoped memory for tpu_custom_call.1']
    #allocation8 [shape = 'u8[32768]{0}', space=vmem, size = 0x8000, scoped, tag = 'output window, operand 0, single buffered']
    %8 = vsyncpa [#allocation4], 0
    %9 = vsyncpa [#allocation7], 0
    %10 = vsyncpa [#allocation5], 0
    // Predicated region
    $region2: #{tpu_custom_call.1} parent=1 // pred_check
      _
    $region3: #{tpu_custom_call.1} parent=1 // pred_check_branch
      %12 = sbr.rel (0) target = $region5
    $region4: #{tpu_custom_call.1} parent=1 // pred_region
      %14 = vsyncadd [#allocation4], 0
      %s15 = sshll.u32 %s0, 4
      %s16 = int_to_ptr.hbm [resolvable:$true] %s15
      %s17 = sshll.u32 [#allocation3], 4
      %s18 = int_to_ptr.vmem [resolvable:$true] %s17
      %23 = dma.hbm_to_vmem [thread:$0]  %s16, 2048, %s18, [#allocation4], 128, 128, 8
    $region5: #{tpu_custom_call.1} parent=1 // pred_fallthru
      _
    // Predicated region
    $region6: #{tpu_custom_call.1} parent=1 // pred_check
      _
    $region7: #{tpu_custom_call.1} parent=1 // pred_check_branch
      %25 = sbr.rel (0) target = $region9
    $region8: #{tpu_custom_call.1} parent=1 // pred_region
      %27 = vsyncadd [#allocation7], 0
      %s28 = sshll.u32 %s1, 4
      %s29 = int_to_ptr.hbm [resolvable:$true] %s28
      %s30 = sshll.u32 [#allocation6], 4
      %s31 = int_to_ptr.vmem [resolvable:$true] %s30
      %36 = dma.hbm_to_vmem [thread:$0]  %s29, 2048, %s31, [#allocation7], 64, 64, 4
    $region9: #{tpu_custom_call.1} parent=1 // pred_fallthru
      _
    // Predicated region
    $region10: #{tpu_custom_call.1} parent=1 // pred_check
      _
    $region11: #{tpu_custom_call.1} parent=1 // pred_check_branch
      %38 = sbr.rel (0) target = $region13
    $region12: #{tpu_custom_call.1} parent=1 // pred_region
      _
    $region13: #{tpu_custom_call.1} parent=1 // pred_fallthru
      _
    // Predicated region
    $region14: #{tpu_custom_call.1} parent=1 // pred_check
      _
    $region15: #{tpu_custom_call.1} parent=1 // pred_check_branch
      %40 = sbr.rel (0) target = $region17
    $region16: #{tpu_custom_call.1} parent=1 // pred_region
      %42 = dma.done [#allocation4], 2048
    $region17: #{tpu_custom_call.1} parent=1 // pred_fallthru
      _
    // Predicated region
    $region18: #{tpu_custom_call.1} parent=1 // pred_check
      _
    $region19: #{tpu_custom_call.1} parent=1 // pred_check_branch
      %44 = sbr.rel (0) target = $region21
    $region20: #{tpu_custom_call.1} parent=1 // pred_region
      %46 = dma.done [#allocation7], 2048
    $region21: #{tpu_custom_call.1} parent=1 // pred_fallthru
      _
    %p47 = scmp.eq.s32.totalorder 0, 0
    // Predicated region
    $region22: #{tpu_custom_call.1} parent=1 // pred_check
      %p48 = pneg %p47
    $region23: #{tpu_custom_call.1} parent=1 // pred_check_branch
      %50 = sbr.rel (%p48) target = $region25
    $region24: #{tpu_custom_call.1} parent=1 // pred_region
      %51 = vst [vmem:[#allocation2] sm:$0xff] 0.0
      %52 = vst [vmem:[#allocation2 + $0x8] sm:$0xff] 0.0
      %53 = vst [vmem:[#allocation2 + $0x10] sm:$0xff] 0.0
      %54 = vst [vmem:[#allocation2 + $0x18] sm:$0xff] 0.0
      %55 = vst [vmem:[#allocation2 + $0x20] sm:$0xff] 0.0
      %56 = vst [vmem:[#allocation2 + $0x28] sm:$0xff] 0.0
      %57 = vst [vmem:[#allocation2 + $0x30] sm:$0xff] 0.0
      %58 = vst [vmem:[#allocation2 + $0x38] sm:$0xff] 0.0
      %59 = vst [vmem:[#allocation2 + $0x40] sm:$0xff] 0.0
      %60 = vst [vmem:[#allocation2 + $0x48] sm:$0xff] 0.0
      %61 = vst [vmem:[#allocation2 + $0x50] sm:$0xff] 0.0
      %62 = vst [vmem:[#allocation2 + $0x58] sm:$0xff] 0.0
      %63 = vst [vmem:[#allocation2 + $0x60] sm:$0xff] 0.0
      %64 = vst [vmem:[#allocation2 + $0x68] sm:$0xff] 0.0
      %65 = vst [vmem:[#allocation2 + $0x70] sm:$0xff] 0.0
      %66 = vst [vmem:[#allocation2 + $0x78] sm:$0xff] 0.0
    $region25: #{tpu_custom_call.1} parent=1 // pred_fallthru
      _
    %v67 = vld [vmem:[#allocation2] sm:$0xff]
    %v68 = vld [vmem:[#allocation2 + $0x8] sm:$0xff]
    %v69 = vld [vmem:[#allocation2 + $0x10] sm:$0xff]
    %v70 = vld [vmem:[#allocation2 + $0x18] sm:$0xff]
    %v71 = vld [vmem:[#allocation2 + $0x20] sm:$0xff]
    %v72 = vld [vmem:[#allocation2 + $0x28] sm:$0xff]
    %v73 = vld [vmem:[#allocation2 + $0x30] sm:$0xff]
    %v74 = vld [vmem:[#allocation2 + $0x38] sm:$0xff]
    %v75 = vld [vmem:[#allocation2 + $0x40] sm:$0xff]
    %v76 = vld [vmem:[#allocation2 + $0x48] sm:$0xff]
    %v77 = vld [vmem:[#allocation2 + $0x50] sm:$0xff]
    %v78 = vld [vmem:[#allocation2 + $0x58] sm:$0xff]
    %v79 = vld [vmem:[#allocation2 + $0x60] sm:$0xff]
    %v80 = vld [vmem:[#allocation2 + $0x68] sm:$0xff]
    %v81 = vld [vmem:[#allocation2 + $0x70] sm:$0xff]
    %v82 = vld [vmem:[#allocation2 + $0x78] sm:$0xff]
    %v83 = vld [vmem:[#allocation3] sm:$0xff]
    %v84 = vld [vmem:[#allocation3 + $0x8] sm:$0xff]
    %v85 = vld [vmem:[#allocation3 + $0x10] sm:$0xff]
    %v86 = vld [vmem:[#allocation3 + $0x18] sm:$0xff]
    %v87 = vld [vmem:[#allocation3 + $0x20] sm:$0xff]
    %v88 = vld [vmem:[#allocation3 + $0x28] sm:$0xff]
    %v89 = vld [vmem:[#allocation3 + $0x30] sm:$0xff]
    %v90 = vld [vmem:[#allocation3 + $0x38] sm:$0xff]
    %v91 = vld [vmem:[#allocation3 + $0x40] sm:$0xff]
    %v92 = vld [vmem:[#allocation3 + $0x48] sm:$0xff]
    %v93 = vld [vmem:[#allocation3 + $0x50] sm:$0xff]
    %v94 = vld [vmem:[#allocation3 + $0x58] sm:$0xff]
    %v95 = vld [vmem:[#allocation3 + $0x60] sm:$0xff]
    %v96 = vld [vmem:[#allocation3 + $0x68] sm:$0xff]
    %v97 = vld [vmem:[#allocation3 + $0x70] sm:$0xff]
    %v98 = vld [vmem:[#allocation3 + $0x78] sm:$0xff]
    %v99 = vld [vmem:[#allocation6] sm:$0xf]
    %v100 = vld [vmem:[#allocation6 + $0x4] sm:$0xf]
    %v101 = vld [vmem:[#allocation6 + $0x8] sm:$0xf]
    %v102 = vld [vmem:[#allocation6 + $0xc] sm:$0xf]
    %v103 = vld [vmem:[#allocation6 + $0x10] sm:$0xf]
    %v104 = vld [vmem:[#allocation6 + $0x14] sm:$0xf]
    %v105 = vld [vmem:[#allocation6 + $0x18] sm:$0xf]
    %v106 = vld [vmem:[#allocation6 + $0x1c] sm:$0xf]
    %v107 = vld [vmem:[#allocation6 + $0x20] sm:$0xf]
    %v108 = vld [vmem:[#allocation6 + $0x24] sm:$0xf]
    %v109 = vld [vmem:[#allocation6 + $0x28] sm:$0xf]
    %v110 = vld [vmem:[#allocation6 + $0x2c] sm:$0xf]
    %v111 = vld [vmem:[#allocation6 + $0x30] sm:$0xf]
    %v112 = vld [vmem:[#allocation6 + $0x34] sm:$0xf]
    %v113 = vld [vmem:[#allocation6 + $0x38] sm:$0xf]
    %v114 = vld [vmem:[#allocation6 + $0x3c] sm:$0xf]
    %v115 = vld [vmem:[#allocation6 + $0x40] sm:$0xf]
    %v116 = vld [vmem:[#allocation6 + $0x44] sm:$0xf]
    %v117 = vld [vmem:[#allocation6 + $0x48] sm:$0xf]
    %v118 = vld [vmem:[#allocation6 + $0x4c] sm:$0xf]
    %v119 = vld [vmem:[#allocation6 + $0x50] sm:$0xf]
    %v120 = vld [vmem:[#allocation6 + $0x54] sm:$0xf]
    %v121 = vld [vmem:[#allocation6 + $0x58] sm:$0xf]
    %v122 = vld [vmem:[#allocation6 + $0x5c] sm:$0xf]
    %v123 = vld [vmem:[#allocation6 + $0x60] sm:$0xf]
    %v124 = vld [vmem:[#allocation6 + $0x64] sm:$0xf]
    %v125 = vld [vmem:[#allocation6 + $0x68] sm:$0xf]
    %v126 = vld [vmem:[#allocation6 + $0x6c] sm:$0xf]
    %v127 = vld [vmem:[#allocation6 + $0x70] sm:$0xf]
    %v128 = vld [vmem:[#allocation6 + $0x74] sm:$0xf]
    %v129 = vld [vmem:[#allocation6 + $0x78] sm:$0xf]
    %v130 = vld [vmem:[#allocation6 + $0x7c] sm:$0xf]
    %v147 = vunpack.c.l.b16 %v83
    %v148 = vunpack.c.h.b16 %v83
    %v149 = vunpack.c.l.b16 %v84
    %v150 = vunpack.c.h.b16 %v84
    %v151 = vunpack.c.l.b16 %v85
    %v152 = vunpack.c.h.b16 %v85
    %v153 = vunpack.c.l.b16 %v86
    %v154 = vunpack.c.h.b16 %v86
    %v155 = vunpack.c.l.b16 %v87
    %v156 = vunpack.c.h.b16 %v87
    %v157 = vunpack.c.l.b16 %v88
    %v158 = vunpack.c.h.b16 %v88
    %v159 = vunpack.c.l.b16 %v89
    %v160 = vunpack.c.h.b16 %v89
    %v161 = vunpack.c.l.b16 %v90
    %v162 = vunpack.c.h.b16 %v90
    %v163 = vunpack.c.l.b16 %v91
    %v164 = vunpack.c.h.b16 %v91
    %v165 = vunpack.c.l.b16 %v92
    %v166 = vunpack.c.h.b16 %v92
    %v167 = vunpack.c.l.b16 %v93
    %v168 = vunpack.c.h.b16 %v93
    %v169 = vunpack.c.l.b16 %v94
    %v170 = vunpack.c.h.b16 %v94
    %v171 = vunpack.c.l.b16 %v95
    %v172 = vunpack.c.h.b16 %v95
    %v173 = vunpack.c.l.b16 %v96
    %v174 = vunpack.c.h.b16 %v96
    %v175 = vunpack.c.l.b16 %v97
    %v176 = vunpack.c.h.b16 %v97
    %v177 = vunpack.c.l.b16 %v98
    %v178 = vunpack.c.h.b16 %v98
    %v179 = vpack.c.b16 %v149, %v147
    %v180 = vpack.c.b16 %v150, %v148
    %v181 = vpack.c.b16 %v153, %v151
    %v182 = vpack.c.b16 %v154, %v152
    %v183 = vpack.c.b16 %v157, %v155
    %v184 = vpack.c.b16 %v158, %v156
    %v185 = vpack.c.b16 %v161, %v159
    %v186 = vpack.c.b16 %v162, %v160
    %v187 = vpack.c.b16 %v165, %v163
    %v188 = vpack.c.b16 %v166, %v164
    %v189 = vpack.c.b16 %v169, %v167
    %v190 = vpack.c.b16 %v170, %v168
    %v191 = vpack.c.b16 %v173, %v171
    %v192 = vpack.c.b16 %v174, %v172
    %v193 = vpack.c.b16 %v177, %v175
    %v194 = vpack.c.b16 %v178, %v176
    %v243 = vunpack.c.l.b16 %v99
    %v244 = vunpack.c.l.b16 %v100
    %v245 = vunpack.c.l.b16 %v101
    %v246 = vunpack.c.l.b16 %v102
    %v247 = vunpack.c.l.b16 %v103
    %v248 = vunpack.c.l.b16 %v104
    %v249 = vunpack.c.l.b16 %v105
    %v250 = vunpack.c.l.b16 %v106
    %v251 = vunpack.c.l.b16 %v107
    %v252 = vunpack.c.l.b16 %v108
    %v253 = vunpack.c.l.b16 %v109
    %v254 = vunpack.c.l.b16 %v110
    %v255 = vunpack.c.l.b16 %v111
    %v256 = vunpack.c.l.b16 %v112
    %v257 = vunpack.c.l.b16 %v113
    %v258 = vunpack.c.l.b16 %v114
    %v259 = vunpack.c.l.b16 %v115
    %v260 = vunpack.c.l.b16 %v116
    %v261 = vunpack.c.l.b16 %v117
    %v262 = vunpack.c.l.b16 %v118
    %v263 = vunpack.c.l.b16 %v119
    %v264 = vunpack.c.l.b16 %v120
    %v265 = vunpack.c.l.b16 %v121
    %v266 = vunpack.c.l.b16 %v122
    %v267 = vunpack.c.l.b16 %v123
    %v268 = vunpack.c.l.b16 %v124
    %v269 = vunpack.c.l.b16 %v125
    %v270 = vunpack.c.l.b16 %v126
    %v271 = vunpack.c.l.b16 %v127
    %v272 = vunpack.c.l.b16 %v128
    %v273 = vunpack.c.l.b16 %v129
    %v274 = vunpack.c.l.b16 %v130
    %v275 = vpack.c.b16 %v244, %v243
    %v276 = vpack.c.b16 %v246, %v245
    %v277 = vpack.c.b16 %v248, %v247
    %v278 = vpack.c.b16 %v250, %v249
    %v279 = vpack.c.b16 %v252, %v251
    %v280 = vpack.c.b16 %v254, %v253
    %v281 = vpack.c.b16 %v256, %v255
    %v282 = vpack.c.b16 %v258, %v257
    %v283 = vpack.c.b16 %v260, %v259
    %v284 = vpack.c.b16 %v262, %v261
    %v285 = vpack.c.b16 %v264, %v263
    %v286 = vpack.c.b16 %v266, %v265
    %v287 = vpack.c.b16 %v268, %v267
    %v288 = vpack.c.b16 %v270, %v269
    %v289 = vpack.c.b16 %v272, %v271
    %v290 = vpack.c.b16 %v274, %v273
    %307 = vmatpush.bf16.msra.mxu0 %v282
    %308 = vmatpush.bf16.msra.mxu0 %v281
    %309 = vmatpush.bf16.msra.mxu0 %v280
    %310 = vmatpush.bf16.msra.mxu0 %v279
    %311 = vmatpush.bf16.msra.mxu0 %v278
    %312 = vmatpush.bf16.msra.mxu0 %v277
    %313 = vmatpush.bf16.msra.mxu0 %v276
    %314 = vmatpush.bf16.msra.mxu0 %v275
    %315 = vmatmul.bf16.gmra.mxu0 %v179
    %v316 = vpop.f32.mrf.mxu0
    %v317 = vadd.f32 0.0, %v316
    %v318 = vpop.f32.mrf.mxu0
    %v319 = vadd.f32 0.0, %v318
    %320 = vmatmul.bf16.gmra.mxu0 %v181
    %v321 = vpop.f32.mrf.mxu0
    %v322 = vadd.f32 0.0, %v321
    %v323 = vpop.f32.mrf.mxu0
    %v324 = vadd.f32 0.0, %v323
    %325 = vmatmul.bf16.gmra.mxu0 %v183
    %v326 = vpop.f32.mrf.mxu0
    %v327 = vadd.f32 0.0, %v326
    %v328 = vpop.f32.mrf.mxu0
    %v329 = vadd.f32 0.0, %v328
    %330 = vmatmul.bf16.gmra.mxu0 %v185
    %v331 = vpop.f32.mrf.mxu0
    %v332 = vadd.f32 0.0, %v331
    %v333 = vpop.f32.mrf.mxu0
    %v334 = vadd.f32 0.0, %v333
    %335 = vmatmul.bf16.gmra.mxu0 %v187
    %v336 = vpop.f32.mrf.mxu0
    %v337 = vadd.f32 0.0, %v336
    %v338 = vpop.f32.mrf.mxu0
    %v339 = vadd.f32 0.0, %v338
    %340 = vmatmul.bf16.gmra.mxu0 %v189
    %v341 = vpop.f32.mrf.mxu0
    %v342 = vadd.f32 0.0, %v341
    %v343 = vpop.f32.mrf.mxu0
    %v344 = vadd.f32 0.0, %v343
    %345 = vmatmul.bf16.gmra.mxu0 %v191
    %v346 = vpop.f32.mrf.mxu0
    %v347 = vadd.f32 0.0, %v346
    %v348 = vpop.f32.mrf.mxu0
    %v349 = vadd.f32 0.0, %v348
    %350 = vmatmul.bf16.gmra.mxu0 %v193
    %v351 = vpop.f32.mrf.mxu0
    %v352 = vadd.f32 0.0, %v351
    %v353 = vpop.f32.mrf.mxu0
    %v354 = vadd.f32 0.0, %v353
    %355 = vdwg.mxu0
    %356 = vmatpush.bf16.msra.mxu0 %v290
    %357 = vmatpush.bf16.msra.mxu0 %v289
    %358 = vmatpush.bf16.msra.mxu0 %v288
    %359 = vmatpush.bf16.msra.mxu0 %v287
    %360 = vmatpush.bf16.msra.mxu0 %v286
    %361 = vmatpush.bf16.msra.mxu0 %v285
    %362 = vmatpush.bf16.msra.mxu0 %v284
    %363 = vmatpush.bf16.msra.mxu0 %v283
    %364 = vmatmul.bf16.gmra.mxu0 %v180
    %v365 = vpop.f32.mrf.mxu0
    %v366 = vadd.f32 %v317, %v365
    %v367 = vpop.f32.mrf.mxu0
    %v368 = vadd.f32 %v319, %v367
    %369 = vmatmul.bf16.gmra.mxu0 %v182
    %v370 = vpop.f32.mrf.mxu0
    %v371 = vadd.f32 %v322, %v370
    %v372 = vpop.f32.mrf.mxu0
    %v373 = vadd.f32 %v324, %v372
    %374 = vmatmul.bf16.gmra.mxu0 %v184
    %v375 = vpop.f32.mrf.mxu0
    %v376 = vadd.f32 %v327, %v375
    %v377 = vpop.f32.mrf.mxu0
    %v378 = vadd.f32 %v329, %v377
    %379 = vmatmul.bf16.gmra.mxu0 %v186
    %v380 = vpop.f32.mrf.mxu0
    %v381 = vadd.f32 %v332, %v380
    %v382 = vpop.f32.mrf.mxu0
    %v383 = vadd.f32 %v334, %v382
    %384 = vmatmul.bf16.gmra.mxu0 %v188
    %v385 = vpop.f32.mrf.mxu0
    %v386 = vadd.f32 %v337, %v385
    %v387 = vpop.f32.mrf.mxu0
    %v388 = vadd.f32 %v339, %v387
    %389 = vmatmul.bf16.gmra.mxu0 %v190
    %v390 = vpop.f32.mrf.mxu0
    %v391 = vadd.f32 %v342, %v390
    %v392 = vpop.f32.mrf.mxu0
    %v393 = vadd.f32 %v344, %v392
    %394 = vmatmul.bf16.gmra.mxu0 %v192
    %v395 = vpop.f32.mrf.mxu0
    %v396 = vadd.f32 %v347, %v395
    %v397 = vpop.f32.mrf.mxu0
    %v398 = vadd.f32 %v349, %v397
    %399 = vmatmul.bf16.gmra.mxu0 %v194
    %v400 = vpop.f32.mrf.mxu0
    %v401 = vadd.f32 %v352, %v400
    %v402 = vpop.f32.mrf.mxu0
    %v403 = vadd.f32 %v354, %v402
    %404 = vdwg.mxu0
    %v405 = vadd.f32 %v67, %v366
    %v406 = vadd.f32 %v68, %v368
    %v407 = vadd.f32 %v69, %v371
    %v408 = vadd.f32 %v70, %v373
    %v409 = vadd.f32 %v71, %v376
    %v410 = vadd.f32 %v72, %v378
    %v411 = vadd.f32 %v73, %v381
    %v412 = vadd.f32 %v74, %v383
    %v413 = vadd.f32 %v75, %v386
    %v414 = vadd.f32 %v76, %v388
    %v415 = vadd.f32 %v77, %v391
    %v416 = vadd.f32 %v78, %v393
    %v417 = vadd.f32 %v79, %v396
    %v418 = vadd.f32 %v80, %v398
    %v419 = vadd.f32 %v81, %v401
    %v420 = vadd.f32 %v82, %v403
    %421 = vst [vmem:[#allocation2] sm:$0xff] %v405
    %422 = vst [vmem:[#allocation2 + $0x8] sm:$0xff] %v406
    %423 = vst [vmem:[#allocation2 + $0x10] sm:$0xff] %v407
    %424 = vst [vmem:[#allocation2 + $0x18] sm:$0xff] %v408
    %425 = vst [vmem:[#allocation2 + $0x20] sm:$0xff] %v409
    %426 = vst [vmem:[#allocation2 + $0x28] sm:$0xff] %v410
    %427 = vst [vmem:[#allocation2 + $0x30] sm:$0xff] %v411
    %428 = vst [vmem:[#allocation2 + $0x38] sm:$0xff] %v412
    %429 = vst [vmem:[#allocation2 + $0x40] sm:$0xff] %v413
    %430 = vst [vmem:[#allocation2 + $0x48] sm:$0xff] %v414
    %431 = vst [vmem:[#allocation2 + $0x50] sm:$0xff] %v415
    %432 = vst [vmem:[#allocation2 + $0x58] sm:$0xff] %v416
    %433 = vst [vmem:[#allocation2 + $0x60] sm:$0xff] %v417
    %434 = vst [vmem:[#allocation2 + $0x68] sm:$0xff] %v418
    %435 = vst [vmem:[#allocation2 + $0x70] sm:$0xff] %v419
    %436 = vst [vmem:[#allocation2 + $0x78] sm:$0xff] %v420
    // Predicated region
    $region26: #{tpu_custom_call.1} parent=1 // pred_check
      %p437 = pneg %p47
    $region27: #{tpu_custom_call.1} parent=1 // pred_check_branch
      %439 = sbr.rel (%p437) target = $region29
    $region28: #{tpu_custom_call.1} parent=1 // pred_region
      %v440 = vld [vmem:[#allocation2] sm:$0xff]
      %v441 = vld [vmem:[#allocation2 + $0x8] sm:$0xff]
      %v442 = vld [vmem:[#allocation2 + $0x10] sm:$0xff]
      %v443 = vld [vmem:[#allocation2 + $0x18] sm:$0xff]
      %v444 = vld [vmem:[#allocation2 + $0x20] sm:$0xff]
      %v445 = vld [vmem:[#allocation2 + $0x28] sm:$0xff]
      %v446 = vld [vmem:[#allocation2 + $0x30] sm:$0xff]
      %v447 = vld [vmem:[#allocation2 + $0x38] sm:$0xff]
      %v448 = vld [vmem:[#allocation2 + $0x40] sm:$0xff]
      %v449 = vld [vmem:[#allocation2 + $0x48] sm:$0xff]
      %v450 = vld [vmem:[#allocation2 + $0x50] sm:$0xff]
      %v451 = vld [vmem:[#allocation2 + $0x58] sm:$0xff]
      %v452 = vld [vmem:[#allocation2 + $0x60] sm:$0xff]
      %v453 = vld [vmem:[#allocation2 + $0x68] sm:$0xff]
      %v454 = vld [vmem:[#allocation2 + $0x70] sm:$0xff]
      %v455 = vld [vmem:[#allocation2 + $0x78] sm:$0xff]
      %v456 = vld [vmem:[%s2] sm:$0x1]
      %v458 = vperm.slane %v456, 0
      %v460 = vadd.f32 %v440, %v458
      %v461 = vadd.f32 %v441, %v458
      %v462 = vadd.f32 %v442, %v458
      %v463 = vadd.f32 %v443, %v458
      %v464 = vadd.f32 %v444, %v458
      %v465 = vadd.f32 %v445, %v458
      %v466 = vadd.f32 %v446, %v458
      %v467 = vadd.f32 %v447, %v458
      %v468 = vadd.f32 %v448, %v458
      %v469 = vadd.f32 %v449, %v458
      %v470 = vadd.f32 %v450, %v458
      %v471 = vadd.f32 %v451, %v458
      %v472 = vadd.f32 %v452, %v458
      %v473 = vadd.f32 %v453, %v458
      %v474 = vadd.f32 %v454, %v458
      %v475 = vadd.f32 %v455, %v458
      %v476 = vmax.f32 %v460, 0.0
      %v477 = vmax.f32 %v461, 0.0
      %v478 = vmax.f32 %v462, 0.0
      %v479 = vmax.f32 %v463, 0.0
      %v480 = vmax.f32 %v464, 0.0
      %v481 = vmax.f32 %v465, 0.0
      %v482 = vmax.f32 %v466, 0.0
      %v483 = vmax.f32 %v467, 0.0
      %v484 = vmax.f32 %v468, 0.0
      %v485 = vmax.f32 %v469, 0.0
      %v486 = vmax.f32 %v470, 0.0
      %v487 = vmax.f32 %v471, 0.0
      %v488 = vmax.f32 %v472, 0.0
      %v489 = vmax.f32 %v473, 0.0
      %v490 = vmax.f32 %v474, 0.0
      %v491 = vmax.f32 %v475, 0.0
      %v492 = vpack.c.bf16 %v476, %v476
      %v493 = vpack.c.bf16 %v477, %v477
      %v494 = vpack.c.bf16 %v478, %v478
      %v495 = vpack.c.bf16 %v479, %v479
      %v496 = vpack.c.bf16 %v480, %v480
      %v497 = vpack.c.bf16 %v481, %v481
      %v498 = vpack.c.bf16 %v482, %v482
      %v499 = vpack.c.bf16 %v483, %v483
      %v500 = vpack.c.bf16 %v484, %v484
      %v501 = vpack.c.bf16 %v485, %v485
      %v502 = vpack.c.bf16 %v486, %v486
      %v503 = vpack.c.bf16 %v487, %v487
      %v504 = vpack.c.bf16 %v488, %v488
      %v505 = vpack.c.bf16 %v489, %v489
      %v506 = vpack.c.bf16 %v490, %v490
      %v507 = vpack.c.bf16 %v491, %v491
      %508 = vst [vmem:[#allocation8] sm:$0xf] %v492
      %509 = vst [vmem:[#allocation8 + $0x4] sm:$0xf] %v493
      %510 = vst [vmem:[#allocation8 + $0x8] sm:$0xf] %v494
      %511 = vst [vmem:[#allocation8 + $0xc] sm:$0xf] %v495
      %512 = vst [vmem:[#allocation8 + $0x10] sm:$0xf] %v496
      %513 = vst [vmem:[#allocation8 + $0x14] sm:$0xf] %v497
      %514 = vst [vmem:[#allocation8 + $0x18] sm:$0xf] %v498
      %515 = vst [vmem:[#allocation8 + $0x1c] sm:$0xf] %v499
      %516 = vst [vmem:[#allocation8 + $0x20] sm:$0xf] %v500
      %517 = vst [vmem:[#allocation8 + $0x24] sm:$0xf] %v501
      %518 = vst [vmem:[#allocation8 + $0x28] sm:$0xf] %v502
      %519 = vst [vmem:[#allocation8 + $0x2c] sm:$0xf] %v503
      %520 = vst [vmem:[#allocation8 + $0x30] sm:$0xf] %v504
      %521 = vst [vmem:[#allocation8 + $0x34] sm:$0xf] %v505
      %522 = vst [vmem:[#allocation8 + $0x38] sm:$0xf] %v506
      %523 = vst [vmem:[#allocation8 + $0x3c] sm:$0xf] %v507
    $region29: #{tpu_custom_call.1} parent=1 // pred_fallthru
      _
    // Predicated region
    $region30: #{tpu_custom_call.1} parent=1 // pred_check
      _
    $region31: #{tpu_custom_call.1} parent=1 // pred_check_branch
      %525 = sbr.rel (0) target = $region33
    $region32: #{tpu_custom_call.1} parent=1 // pred_region
      %527 = vsyncadd [#allocation5], 0
      %s528 = sshll.u32 [#allocation8], 4
      %s529 = int_to_ptr.vmem [resolvable:$true] %s528
      %s530 = sshll.u32 %s3, 4
      %s531 = int_to_ptr.hbm [resolvable:$true] %s530
      %536 = dma.vmem_to_hbm [thread:$0]  %s529, 1024, %s531, [#allocation5], 64, 64, 4
    $region33: #{tpu_custom_call.1} parent=1 // pred_fallthru
      _
    // Predicated region
    $region34: #{tpu_custom_call.1} parent=1 // pred_check
      _
    $region35: #{tpu_custom_call.1} parent=1 // pred_check_branch
      %538 = sbr.rel (0) target = $region37
    $region36: #{tpu_custom_call.1} parent=1 // pred_region
      %540 = dma.done [#allocation5], 1024
    $region37: #{tpu_custom_call.1} parent=1 // pred_fallthru
      _
    %541 = vsyncpa [#allocation4], 1
    %542 = vsyncpa [#allocation7], 1
    %543 = vsyncpa [#allocation5], 1

</llo_original>
